<compile_context>
chip_gen: v7x
topology: tpu7x:2x2x1
jax: 0.10.0
libtpu: 0.0.40
codegen_flags: <defaults>
</compile_context>

<pallas_src>
import functools

import numpy as np
import jax
import jax.numpy as jnp
from jax import lax
from jax.experimental import pallas as pl
from jax.experimental.pallas import tpu as pltpu


def _tpu_memory_budget():
    """Generation-aware (per-input per-buffer tile bytes, vmem_limit_bytes)."""
    try:
        cap = int(pltpu.get_tpu_info().vmem_capacity_bytes)
    except Exception:
        cap = 64 * 1024 * 1024  # conservative default (v7x per-TC VMEM)
    tile = min(cap // 12, 12 * 1024 * 1024)        # ~5.3 MiB on v7x, ~10.7 MiB on v5e/v6e
    limit = min(int(cap * 3 // 4), 100 * 1024 * 1024)  # 48 MiB on v7x, 96 MiB on v5e/v6e
    return tile, limit


def _nmse_kernel(cw_ref,     # SMEM (BC,) f32      per-row (channel) weights (scalar prefetch)
                 yhat_ref,   # VMEM (tbc, S, L)    native dtype
                 y_ref,      # VMEM (tbc, S, L)    native dtype
                 latw_ref,   # VMEM (S, L) or (S,1) f32 resident spatial weight
                 out_ref,    # VMEM (1, 1, 1)      per-core partial (already * inv_n)
                 acc_ref,    # VMEM (S, L) f32     scratch accumulator
                 *, ni, nb, tbc, inv_n, apply_cw, padded, unroll):
    p = pl.program_id(0)
    i = pl.program_id(1)

    @pl.when(i == 0)
    def _init():
        acc_ref[...] = jnp.zeros_like(acc_ref)

    blk = p * ni + i  # global block index along fused B*C axis (may overrun on padded tail)

    def _accumulate():
        base = blk * tbc

        def row(r, carry):
            # Upcast in-vreg; HBM only ever sees the native dtype.
            d = yhat_ref[r].astype(jnp.float32) - y_ref[r].astype(jnp.float32)
            sq = d * d
            if apply_cw:
                sq = cw_ref[base + r] * sq     # scalar (SMEM) * slab: one VPU mul
            acc_ref[...] += sq                 # pure VPU adds, no per-step XLU reduce
            return carry

        lax.fori_loop(0, tbc, row, 0, unroll=unroll)

    if padded:
        pl.when(blk < nb)(_accumulate)         # skip duplicate (clamped) tail block
    else:
        _accumulate()

    @pl.when(i == ni - 1)
    def _finalize():
        # Latitude weight applied once per core, then a single cross-lane reduce.
        total = jnp.sum(acc_ref[...] * latw_ref[...])
        out_ref[...] = (total * jnp.float32(inv_n)).reshape(1, 1, 1)


def _choose_block_rows(bc, row_vmem_bytes, tile_bytes):
    """Largest divisor of `bc` whose slab fits the byte target while keeping enough
    grid steps (>= ~3 per core after the 2-way split) for pipeline overlap."""
    min_blocks = min(bc, 6)
    best = 1
    for d in range(1, bc + 1):
        if bc % d:
            continue
        if d * row_vmem_bytes <= tile_bytes and (bc // d) >= min_blocks:
            best = d
    return best


def normalized_mse_loss(y_hat, y, lats, feature_weights=None):
    """Pallas equivalent of NormalizedMSELoss.forward(y_hat, {'y': y})."""
    if y_hat.shape != y.shape:
        raise ValueError(
            f"Unable to bring inputs y_hat and y with shapes {y_hat.shape} "
            f"and {y.shape} into same shape.")
    B, C, H, W = y_hat.shape
    BC = B * C
    HW = H * W

    lats = jnp.asarray(lats, jnp.float32)
    assert lats.shape == (H,)
    lat_w = jnp.cos(lats * jnp.pi / 180.0)                       # (H,)

    apply_cw = feature_weights is not None
    if apply_cw:
        feat_w = jnp.asarray(feature_weights, jnp.float32).reshape(C)
        cw = jnp.tile(feat_w, B)                                 # (BC,) tiny SMEM array
    else:
        cw = jnp.ones((BC,), jnp.float32)                        # placeholder (never read)

    if HW % 128 == 0:
        # Lane-dense fold: (H, W) -> (S, 128); spatial weight is a tiny resident
        # (S, 128) f32 array (HW*4 bytes), DMA'd once.
        S, L = HW // 128, 128
        data_view = (BC, S, L)
        latw = jnp.broadcast_to(lat_w[:, None], (H, W)).reshape(S, L)
    else:
        # Keep (H, W) — block covers full spatial dims (always legal); spatial weight
        # stays (H, 1) so it lane-broadcasts (no W pre-broadcast in HBM/VMEM).
        # Lane-sparse only when W << 128 with HW % 128 != 0; still HBM-bound there.
        S, L = H, W
        data_view = (BC, H, W)
        latw = lat_w.reshape(H, 1)

    yh = y_hat.reshape(data_view)   # native dtype passthrough (free view)
    yt = y.reshape(data_view)

    itemsize = y_hat.dtype.itemsize
    padded_L = -(-L // 128) * 128
    padded_S = -(-S // 8) * 8
    row_vmem_bytes = padded_S * padded_L * itemsize   # VMEM footprint of one (S,L) row

    tile_bytes, vmem_limit = _tpu_memory_budget()
    tbc = _choose_block_rows(BC, row_vmem_bytes, tile_bytes)
    nb = BC // tbc
    P = 2 if nb >= 2 else 1          # both v7x TensorCores always get work
    ni = -(-nb // P)                 # cdiv
    padded_grid = (P * ni != nb)     # odd nb -> clamp index + skip duplicate tail

    n = B * C * H * W
    inv_n = 1.0 / float(n)
    unroll = tbc <= 8

    kernel = functools.partial(
        _nmse_kernel, ni=ni, nb=nb, tbc=tbc, inv_n=inv_n,
        apply_cw=apply_cw, padded=padded_grid, unroll=unroll)

    if padded_grid:
        def data_idx(p, i, cw_ref):
            return (jnp.minimum(p * ni + i, nb - 1), 0, 0)
    else:
        def data_idx(p, i, cw_ref):
            return (p * ni + i, 0, 0)

    cost = pl.CostEstimate(
        flops=5 * n,
        transcendentals=0,
        bytes_accessed=2 * n * itemsize + int(latw.size + BC) * 4 + P * 4)

    partials = pl.pallas_call(
        kernel,
        out_shape=jax.ShapeDtypeStruct((P, 1, 1), jnp.float32),
        grid_spec=pltpu.PrefetchScalarGridSpec(
            num_scalar_prefetch=1,           # channel weights -> SMEM
            grid=(P, ni),
            in_specs=[
                pl.BlockSpec((tbc, S, L), data_idx),
                pl.BlockSpec((tbc, S, L), data_idx),
                # Resident spatial weight: constant index -> DMA'd once, stays in VMEM.
                pl.BlockSpec(latw.shape, lambda p, i, cw_ref: (0, 0)),
            ],
            out_specs=pl.BlockSpec((1, 1, 1), lambda p, i, cw_ref: (p, 0, 0)),
            scratch_shapes=[pltpu.VMEM((S, L), jnp.float32)],
        ),
        compiler_params=pltpu.CompilerParams(
            dimension_semantics=("parallel", "arbitrary"),
            vmem_limit_bytes=int(vmem_limit)),
        cost_estimate=cost,
    )(cw, yh, yt, latw)

    # P tiny per-core partials (already scaled by inv_n) -> final mean.
    return jnp.sum(partials)


if __name__ == "__main__":
    key = jax.random.PRNGKey(0)
    k1, k2, k3, k4, k5, k6 = jax.random.split(key, 6)

    # --- test 1: f32 inputs, small W, feature weights (lane-dense folded path) ---
    B, C, H, W = 2, 4, 16, 16
    lats = np.linspace(-80.0, 80.0, H)                      # degrees
    feature_weights = jnp.arange(1, C + 1, dtype=jnp.float32) / C
    y_hat = jax.random.normal(k1, (B, C, H, W), dtype=jnp.float32)
    y = jax.random.normal(k2, (B, C, H, W), dtype=jnp.float32)

    loss = jax.block_until_ready(normalized_mse_loss(y_hat, y, lats, feature_weights))

    lw = jnp.cos(jnp.asarray(lats, jnp.float32) * jnp.pi / 180.0).reshape(1, 1, H, 1)
    fw = feature_weights.reshape(1, C, 1, 1)
    ref = jnp.mean(fw * lw * (y_hat - y) ** 2)
    assert not jnp.isnan(loss)
    assert jnp.allclose(loss, ref, rtol=1e-5, atol=1e-6), (loss, ref)

    # --- test 2: bf16 inputs, wide W, no feature weights (native-dtype streaming) ---
    B2, C2, H2, W2 = 2, 3, 8, 256
    lats2 = np.linspace(-88.0, 88.0, H2)
    yh2 = jax.random.normal(k3, (B2, C2, H2, W2), dtype=jnp.float32).astype(jnp.bfloat16)
    y2 = jax.random.normal(k4, (B2, C2, H2, W2), dtype=jnp.float32).astype(jnp.bfloat16)

    loss2 = jax.block_until_ready(normalized_mse_loss(yh2, y2, lats2))

    lw2 = jnp.cos(jnp.asarray(lats2, jnp.float32) * jnp.pi / 180.0).reshape(1, 1, H2, 1)
    d2 = yh2.astype(jnp.float32) - y2.astype(jnp.float32)
    ref2 = jnp.mean(lw2 * d2 * d2)
    assert not jnp.isnan(loss2)
    assert jnp.allclose(loss2, ref2, rtol=1e-4, atol=1e-5), (loss2, ref2)

    # --- test 3: HW % 128 != 0 and odd block count (keep-HW path + padded 2-core grid) ---
    B3, C3, H3, W3 = 1, 5, 10, 96
    lats3 = np.linspace(-60.0, 60.0, H3)
    fw3 = jnp.linspace(0.5, 1.5, C3, dtype=jnp.float32)
    yh3 = jax.random.normal(k5, (B3, C3, H3, W3), dtype=jnp.float32)
    y3 = jax.random.normal(k6, (B3, C3, H3, W3), dtype=jnp.float32)

    loss3 = jax.block_until_ready(normalized_mse_loss(yh3, y3, lats3, fw3))

    lw3 = jnp.cos(jnp.asarray(lats3, jnp.float32) * jnp.pi / 180.0).reshape(1, 1, H3, 1)
    ref3 = jnp.mean(fw3.reshape(1, C3, 1, 1) * lw3 * (yh3 - y3) ** 2)
    assert not jnp.isnan(loss3)
    assert jnp.allclose(loss3, ref3, rtol=1e-5, atol=1e-6), (loss3, ref3)

    print("KERNEL_OK")
</pallas_src>

<mosaic_0001>
module attributes {stable_mosaic.version = 11 : i64} {
  func.func @_nmse_kernel(%arg0: i32, %arg1: i32, %arg2: memref<8xf32, #tpu.memory_space<smem>>, %arg3: memref<1x2x128xf32, #tpu.memory_space<vmem>>, %arg4: memref<1x2x128xf32, #tpu.memory_space<vmem>>, %arg5: memref<2x128xf32, #tpu.memory_space<vmem>>, %arg6: memref<1x1x1xf32, #tpu.memory_space<vmem>>, %arg7: memref<2x128xf32, #tpu.memory_space<vmem>>) attributes {dimension_semantics = [#tpu.dimension_semantics<parallel>, #tpu.dimension_semantics<arbitrary>], iteration_bounds = array<i64: 2, 4>, scalar_prefetch = 1 : i64, scratch_operands = 1 : i64, tpu.core_type = #tpu.core_type<tc>, window_params = [{transform_indices = @transform_0, window_bounds = array<i64: 1, 2, 128>}, {transform_indices = @transform_1, window_bounds = array<i64: 1, 2, 128>}, {pipeline_mode = #tpu.pipeline_mode<synchronous>, transform_indices = @transform_2, window_bounds = array<i64: 2, 128>}, {transform_indices = @transform_3, window_bounds = array<i64: 1, 1, 1>}]} {
    %c0_i32 = arith.constant 0 : i32
    %0 = arith.cmpi eq, %arg1, %c0_i32 : i32
    %1 = arith.extui %0 : i1 to i32
    %c0_i32_0 = arith.constant 0 : i32
    %2 = arith.cmpi ne, %1, %c0_i32_0 : i32
    scf.if %2 {
      %cst = arith.constant 0.000000e+00 : f32
      %25 = vector.broadcast %cst : f32 to vector<2x128xf32>
      %c0_11 = arith.constant 0 : index
      %c0_12 = arith.constant 0 : index
      %26 = vector.load %arg7[%c0_11, %c0_12] : memref<2x128xf32, #tpu.memory_space<vmem>>, vector<2x128xf32>
      tpu.vector_store %arg7[%c0_11, %c0_12], %25 {strides = array<i32>} : memref<2x128xf32, #tpu.memory_space<vmem>>, vector<2x128xf32>,
    } else {
    }
    %c4_i32 = arith.constant 4 : i32
    %3 = arith.muli %arg0, %c4_i32 : i32
    %4 = arith.addi %3, %arg1 : i32
    %c1_i32 = arith.constant 1 : i32
    %5 = arith.muli %4, %c1_i32 : i32
    %c0_i32_1 = arith.constant 0 : i32
    %6 = arith.index_cast %c0_i32_1 : i32 to index
    %c0 = arith.constant 0 : index
    %c0_2 = arith.constant 0 : index
    %7 = vector.load %arg3[%6, %c0, %c0_2] : memref<1x2x128xf32, #tpu.memory_space<vmem>>, vector<1x2x128xf32>
    %8 = vector.shape_cast %7 : vector<1x2x128xf32> to vector<2x128xf32>
    %9 = arith.index_cast %c0_i32_1 : i32 to index
    %c0_3 = arith.constant 0 : index
    %c0_4 = arith.constant 0 : index
    %10 = vector.load %arg4[%9, %c0_3, %c0_4] : memref<1x2x128xf32, #tpu.memory_space<vmem>>, vector<1x2x128xf32>
    %11 = vector.shape_cast %10 : vector<1x2x128xf32> to vector<2x128xf32>
    %12 = arith.subf %8, %11 : vector<2x128xf32>
    %13 = arith.mulf %12, %12 : vector<2x128xf32>
    %14 = arith.addi %5, %c0_i32_1 : i32
    %15 = arith.index_cast %14 : i32 to index
    %16 = memref.load %arg2[%15] : memref<8xf32, #tpu.memory_space<smem>>
    %17 = vector.broadcast %16 : f32 to vector<2x128xf32>
    %18 = arith.mulf %17, %13 : vector<2x128xf32>
    %c0_5 = arith.constant 0 : index
    %c0_6 = arith.constant 0 : index
    %19 = vector.load %arg7[%c0_5, %c0_6] : memref<2x128xf32, #tpu.memory_space<vmem>>, vector<2x128xf32>
    %20 = arith.addf %19, %18 : vector<2x128xf32>
    %c0_7 = arith.constant 0 : index
    %c0_8 = arith.constant 0 : index
    %21 = vector.load %arg7[%c0_7, %c0_8] : memref<2x128xf32, #tpu.memory_space<vmem>>, vector<2x128xf32>
    tpu.vector_store %arg7[%c0_7, %c0_8], %20 {strides = array<i32>} : memref<2x128xf32, #tpu.memory_space<vmem>>, vector<2x128xf32>,
    %c1_i32_9 = arith.constant 1 : i32
    %c3_i32 = arith.constant 3 : i32
    %22 = arith.cmpi eq, %arg1, %c3_i32 : i32
    %23 = arith.extui %22 : i1 to i32
    %c0_i32_10 = arith.constant 0 : i32
    %24 = arith.cmpi ne, %23, %c0_i32_10 : i32
    scf.if %24 {
      %c0_11 = arith.constant 0 : index
      %c0_12 = arith.constant 0 : index
      %25 = vector.load %arg7[%c0_11, %c0_12] : memref<2x128xf32, #tpu.memory_space<vmem>>, vector<2x128xf32>
      %c0_13 = arith.constant 0 : index
      %c0_14 = arith.constant 0 : index
      %26 = vector.load %arg5[%c0_13, %c0_14] : memref<2x128xf32, #tpu.memory_space<vmem>>, vector<2x128xf32>
      %27 = arith.mulf %25, %26 : vector<2x128xf32>
      %28 = vector.shape_cast %27 : vector<2x128xf32> to vector<1x2x128xf32>
      %cst = arith.constant dense<0.000000e+00> : vector<1xf32>
      %29 = vector.multi_reduction <add>, %28, %cst [1, 2] : vector<1x2x128xf32> to vector<1xf32>
      %30 = vector.shape_cast %29 : vector<1xf32> to vector<1x1x1xf32>
      %31 = vector.extract %30[0, 0, 0] : f32 from vector<1x1x1xf32>
      %cst_15 = arith.constant 4.8828125E-4 : f32
      %32 = arith.mulf %31, %cst_15 : f32
      %33 = vector.broadcast %32 : f32 to vector<1x1x1xf32>
      %c0_16 = arith.constant 0 : index
      %c0_17 = arith.constant 0 : index
      %c0_18 = arith.constant 0 : index
      %34 = vector.load %arg6[%c0_16, %c0_17, %c0_18] : memref<1x1x1xf32, #tpu.memory_space<vmem>>, vector<1x1x1xf32>
      tpu.vector_store %arg6[%c0_16, %c0_17, %c0_18], %33 {strides = array<i32>} : memref<1x1x1xf32, #tpu.memory_space<vmem>>, vector<1x1x1xf32>,
    } else {
    }
    return
  }
  func.func @transform_0(%arg0: i32, %arg1: i32, %arg2: memref<8xf32, #tpu.memory_space<smem>>) -> (i32, i32, i32) {
    %c4_i32 = arith.constant 4 : i32
    %0 = arith.muli %arg0, %c4_i32 : i32
    %1 = arith.addi %0, %arg1 : i32
    %c0_i32 = arith.constant 0 : i32
    %c0_i32_0 = arith.constant 0 : i32
    %c0_i32_1 = arith.constant 0 : i32
    return %1, %c0_i32, %c0_i32_0 : i32, i32, i32
  }
  func.func @transform_1(%arg0: i32, %arg1: i32, %arg2: memref<8xf32, #tpu.memory_space<smem>>) -> (i32, i32, i32) {
    %c4_i32 = arith.constant 4 : i32
    %0 = arith.muli %arg0, %c4_i32 : i32
    %1 = arith.addi %0, %arg1 : i32
    %c0_i32 = arith.constant 0 : i32
    %c0_i32_0 = arith.constant 0 : i32
    %c0_i32_1 = arith.constant 0 : i32
    return %1, %c0_i32, %c0_i32_0 : i32, i32, i32
  }
  func.func @transform_2(%arg0: i32, %arg1: i32, %arg2: memref<8xf32, #tpu.memory_space<smem>>) -> (i32, i32) {
    %c0_i32 = arith.constant 0 : i32
    %c0_i32_0 = arith.constant 0 : i32
    %c0_i32_1 = arith.constant 0 : i32
    return %c0_i32, %c0_i32_0 : i32, i32
  }
  func.func @transform_3(%arg0: i32, %arg1: i32, %arg2: memref<8xf32, #tpu.memory_space<smem>>) -> (i32, i32, i32) {
    %c0_i32 = arith.constant 0 : i32
    %c0_i32_0 = arith.constant 0 : i32
    %c0_i32_1 = arith.constant 0 : i32
    return %arg0, %c0_i32, %c0_i32_0 : i32, i32, i32
  }
}

</mosaic_0001>

<llo_original>
// kernel: tpu_custom_call.1
$region0: #{tpu_custom_call.1}
  #allocation0 [shape = 'u32[]', space=smem, size = 0x4, offset = 0x4, fixed_abs, tag = 'smem constant byte address 0x4 - core index']
  #allocation1 [shape = 'u32[144,128]{1,0:T(1,128)}', space=vmem, size = 0x12000, scoped, tag = 'internal scratch']
  #allocation2 [shape = 'f32[2,128]{1,0:T(2,128)}', space=vmem, size = 0x400, scoped, tag = 'scratch operand']
  #allocation3 [shape = 's32[1]{0}', space=sflag, size = 0x4, scoped, tag = 'scoped memory for tpu_custom_call.1']
  #allocation4 [shape = 'u8[512]{0}', space=smem, size = 0x200, scoped, tag = 'prefetched SMEM operand 0']
  %s0 = inlined_call_operand.hbm [shape: f32[8], index: 0, kind: input, shape index: {}]
  %s1 = inlined_call_operand.hbm [shape: f32[8,2,128], index: 1, kind: input, shape index: {}]
  %s2 = inlined_call_operand.hbm [shape: f32[8,2,128], index: 2, kind: input, shape index: {}]
  %s3 = inlined_call_operand.vmem [shape: f32[2,128], index: 3, kind: input, shape index: {}]
  %s4 = inlined_call_operand.vmem [shape: f32[2,1,1], index: 4, kind: output, shape index: {}]
  %s5 = sld [smem:[#allocation0]]
  $region61: #{tpu_custom_call.1} parent=0
    _
  %s7 = ssub.s32 1, %s5
  %s8 = scalar_select 0, %s7, %s5
  %10 = dma.hbm_to_smem %s0, 16, [#allocation4], [#allocation3]
  %11 = dma.done [#allocation3], 16
  %12 = sfence
  $region1: #{tpu_custom_call.1} parent=0
    #allocation5 [shape = 'u8[2048]{0}', space=vmem, size = 0x800, scoped, tag = 'input window, operand 1']
    #allocation6 [shape = 's32[2]{0}', space=sflag, size = 0x8, scoped, tag = 'scoped memory for tpu_custom_call.1']
    #allocation7 [shape = 'u8[2048]{0}', space=vmem, size = 0x800, scoped, tag = 'input window, operand 2']
    #allocation8 [shape = 's32[2]{0}', space=sflag, size = 0x8, scoped, tag = 'scoped memory for tpu_custom_call.1']
    %13 = vsyncpa [#allocation6], 0
    %s14 = scalar_lea.sflag [#allocation6], 1
    %15 = vsyncpa %s14, 0
    %16 = vsyncpa [#allocation8], 0
    %s17 = scalar_lea.sflag [#allocation8], 1
    %18 = vsyncpa %s17, 0
    loop: start=0, step=1, limit=10
    $region2: #{tpu_custom_call.1} parent=1 // loop_pre_header
      _
    $region3: #{tpu_custom_call.1} parent=1 // loop_header
      %s20 = sphi 0, %s24
      %p21 = scmp.ge.s32.totalorder %s20, 10
      %s27 = sphi 0, %s39
      %s28 = sphi 0, %s35
      %s29 = sphi 0, %s27
      %s30 = sphi 0, %s28
      %s31 = sphi 0, %s29
      %s32 = sphi 0, %s30
      %s46 = sphi 0, %s48
      %s49 = sphi 0, %s46
      %s50 = sphi 0, %s49
      %s66 = sphi 0, %s50
      %s76 = sphi 0, %s78
      %s79 = sphi 0, %s76
      %s80 = sphi 0, %s79
      %s96 = sphi 0, %s80
      %s100 = sphi 0, %s100
      %s102 = sphi 0, %s100
      %s103 = sphi 0, %s102
      %s117 = sphi 0, %s103
      %s123 = sphi 0, %s125
      %s126 = sphi 0, %s123
      %s127 = sphi 0, %s126
      %s143 = sphi 0, %s127
    $region4: #{tpu_custom_call.1} parent=1 // loop_header_branch
      %23 = sbr.rel (%p21) target = $region8
    $region5: #{tpu_custom_call.1} parent=1 // loop_body
      %s25 = ssub.s32 %s20, 1
      %s26 = ssub.s32 %s20, 2
      %s33 = sadd.s32 1, %s28
      %p34 = scmp.ge.s32.totalorder %s33, 4
      %s35 = scalar_select %p34, 0, %s33
      %s36 = sadd.s32 1, %s27
      %s37 = scalar_select %p34, %s36, %s27
      %p38 = scmp.ge.s32.totalorder %s37, 2
      %s39 = scalar_select %p38, 0, %s37
      %s40 = smul.u32 %s27, 4
      %s41 = sadd.s32 %s40, %s28
      %s42 = smul.u32 %s39, 4
      %s43 = sadd.s32 %s42, %s35
      %s44 = ssub.s32 %s41, %s43
      %p45 = scmp.eq.s32.totalorder %s44, 0
      %s47 = sadd.s32 %s46, 1
      %s48 = scalar_select %p45, %s46, %s47
      %p51 = pneg %p45
      %p52 = scmp.eq.s32.totalorder %s20, 7
      %p53 = por %p51, %p52
      %p54 = scmp.ne.s32.totalorder %s46, %s49
      %p55 = scmp.eq.s32.totalorder %s20, 0
      %p56 = por %p54, %p55
      %p57 = scmp.ne.s32.totalorder %s46, %s49
      %p58 = scmp.eq.s32.totalorder %s25, 7
      %p59 = por %p57, %p58
      %p60 = scmp.ne.s32.totalorder %s49, %s50
      %p61 = scmp.eq.s32.totalorder %s25, 0
      %p62 = por %p60, %p61
      %p63 = scmp.ne.s32.totalorder %s49, %s50
      %p64 = scmp.eq.s32.totalorder %s26, 7
      %p65 = por %p63, %p64
      %p67 = scmp.ne.s32.totalorder %s50, %s66
      %p68 = scmp.eq.s32.totalorder %s26, 0
      %p69 = por %p67, %p68
      %s70 = smul.u32 %s27, 4
      %s71 = sadd.s32 %s70, %s28
      %s72 = smul.u32 %s39, 4
      %s73 = sadd.s32 %s72, %s35
      %s74 = ssub.s32 %s71, %s73
      %p75 = scmp.eq.s32.totalorder %s74, 0
      %s77 = sadd.s32 %s76, 1
      %s78 = scalar_select %p75, %s76, %s77
      %p81 = pneg %p75
      %p82 = scmp.eq.s32.totalorder %s20, 7
      %p83 = por %p81, %p82
      %p84 = scmp.ne.s32.totalorder %s76, %s79
      %p85 = scmp.eq.s32.totalorder %s20, 0
      %p86 = por %p84, %p85
      %p87 = scmp.ne.s32.totalorder %s76, %s79
      %p88 = scmp.eq.s32.totalorder %s25, 7
      %p89 = por %p87, %p88
      %p90 = scmp.ne.s32.totalorder %s79, %s80
      %p91 = scmp.eq.s32.totalorder %s25, 0
      %p92 = por %p90, %p91
      %p93 = scmp.ne.s32.totalorder %s79, %s80
      %p94 = scmp.eq.s32.totalorder %s26, 7
      %p95 = por %p93, %p94
      %p97 = scmp.ne.s32.totalorder %s80, %s96
      %p98 = scmp.eq.s32.totalorder %s26, 0
      %p99 = por %p97, %p98
      %s101 = sadd.s32 %s100, 1
      %p104 = scmp.eq.s32.totalorder %s20, 7
      %p105 = scmp.ne.s32.totalorder %s100, %s102
      %p106 = scmp.eq.s32.totalorder %s20, 0
      %p107 = por %p105, %p106
      %p108 = scmp.ne.s32.totalorder %s100, %s102
      %p109 = scmp.eq.s32.totalorder %s25, 7
      %p110 = por %p108, %p109
      %p111 = scmp.ne.s32.totalorder %s102, %s103
      %p112 = scmp.eq.s32.totalorder %s25, 0
      %p113 = por %p111, %p112
      %p114 = scmp.ne.s32.totalorder %s102, %s103
      %p115 = scmp.eq.s32.totalorder %s26, 7
      %p116 = por %p114, %p115
      %p118 = scmp.ne.s32.totalorder %s103, %s117
      %p119 = scmp.eq.s32.totalorder %s26, 0
      %p120 = por %p118, %p119
      %s121 = ssub.s32 %s27, %s39
      %p122 = scmp.eq.s32.totalorder %s121, 0
      %s124 = sadd.s32 %s123, 1
      %s125 = scalar_select %p122, %s123, %s124
      %p128 = pneg %p122
      %p129 = scmp.eq.s32.totalorder %s20, 7
      %p130 = por %p128, %p129
      %p131 = scmp.ne.s32.totalorder %s123, %s126
      %p132 = scmp.eq.s32.totalorder %s20, 0
      %p133 = por %p131, %p132
      %p134 = scmp.ne.s32.totalorder %s123, %s126
      %p135 = scmp.eq.s32.totalorder %s25, 7
      %p136 = por %p134, %p135
      %p137 = scmp.ne.s32.totalorder %s126, %s127
      %p138 = scmp.eq.s32.totalorder %s25, 0
      %p139 = por %p137, %p138
      %p140 = scmp.ne.s32.totalorder %s126, %s127
      %p141 = scmp.eq.s32.totalorder %s26, 7
      %p142 = por %p140, %p141
      %p144 = scmp.ne.s32.totalorder %s127, %s143
      %p145 = scmp.eq.s32.totalorder %s26, 0
      %p146 = por %p144, %p145
      %p147 = scmp.le.s32.totalorder 1, %s20
      %p148 = scmp.lt.s32.totalorder %s20, 9
      %p149 = pnand %p147, %p148
      %p150 = pneg %p149
      // Predicated region
      $region9: #{tpu_custom_call.1} parent=5 // pred_check
        _
      $region10: #{tpu_custom_call.1} parent=5 // pred_check_branch
        %152 = sbr.rel (%p149) target = $region12
      $region11: #{tpu_custom_call.1} parent=5 // pred_region
        %s153 = ssub.s32 %s20, 1
        // Predicated region
        $region13: #{tpu_custom_call.1} parent=11 // pred_check
          %p154 = pneg %p113
        $region14: #{tpu_custom_call.1} parent=11 // pred_check_branch
          %156 = sbr.rel (%p154) target = $region16
        $region15: #{tpu_custom_call.1} parent=11 // pred_region
          _
        $region16: #{tpu_custom_call.1} parent=11 // pred_fallthru
          _
      $region12: #{tpu_custom_call.1} parent=5 // pred_fallthru
        _
      %p157 = scmp.lt.s32.totalorder %s20, 8
      // Predicated region
      $region17: #{tpu_custom_call.1} parent=5 // pred_check
        %p158 = pneg %p157
      $region18: #{tpu_custom_call.1} parent=5 // pred_check_branch
        %160 = sbr.rel (%p158) target = $region20
      $region19: #{tpu_custom_call.1} parent=5 // pred_region
        // Predicated region
        $region21: #{tpu_custom_call.1} parent=19 // pred_check
          %p161 = pneg %p56
        $region22: #{tpu_custom_call.1} parent=19 // pred_check_branch
          %163 = sbr.rel (%p161) target = $region24
        $region23: #{tpu_custom_call.1} parent=19 // pred_region
          %s164 = sand.u32 %s46, 1
          %s165 = scalar_lea.sflag [#allocation6], %s164
          %s166 = sand.u32 %s46, 1
          %s167 = smul.addr %s166, 2
          %s168 = scalar_lea.vmem [#allocation5], %s167
          %s169 = smul.u32 %s27, 4
          %s170 = sadd.s32 %s169, %s28
          %s172 = ssub.s32 32, 32
          %173 = vsyncadd %s165, %s172
          %s174 = smul.addr %s170, 32
          %s175 = scalar_lea.hbm %s1, %s174
          %s177 = sshll.u32 %s168, 4
          %s178 = int_to_ptr.vmem [resolvable:$true] %s177
          %180 = dma.hbm_to_vmem [thread:$0]  %s175, 32, %s178, %s165
        $region24: #{tpu_custom_call.1} parent=19 // pred_fallthru
          _
        // Predicated region
        $region25: #{tpu_custom_call.1} parent=19 // pred_check
          %p181 = pneg %p86
        $region26: #{tpu_custom_call.1} parent=19 // pred_check_branch
          %183 = sbr.rel (%p181) target = $region28
        $region27: #{tpu_custom_call.1} parent=19 // pred_region
          %s184 = sand.u32 %s76, 1
          %s185 = scalar_lea.sflag [#allocation8], %s184
          %s186 = sand.u32 %s76, 1
          %s187 = smul.addr %s186, 2
          %s188 = scalar_lea.vmem [#allocation7], %s187
          %s189 = smul.u32 %s27, 4
          %s190 = sadd.s32 %s189, %s28
          %s192 = ssub.s32 32, 32
          %193 = vsyncadd %s185, %s192
          %s194 = smul.addr %s190, 32
          %s195 = scalar_lea.hbm %s2, %s194
          %s197 = sshll.u32 %s188, 4
          %s198 = int_to_ptr.vmem [resolvable:$true] %s197
          %200 = dma.hbm_to_vmem [thread:$0]  %s195, 32, %s198, %s185
        $region28: #{tpu_custom_call.1} parent=19 // pred_fallthru
          _
      $region20: #{tpu_custom_call.1} parent=5 // pred_fallthru
        _
      %p201 = scmp.le.s32.totalorder 1, %s20
      %p202 = scmp.lt.s32.totalorder %s20, 9
      %p203 = pnand %p201, %p202
      %p204 = pneg %p203
      // Predicated region
      $region29: #{tpu_custom_call.1} parent=5 // pred_check
        _
      $region30: #{tpu_custom_call.1} parent=5 // pred_check_branch
        %206 = sbr.rel (%p203) target = $region32
      $region31: #{tpu_custom_call.1} parent=5 // pred_region
        %s207 = ssub.s32 %s20, 1
        %s208 = sand.u32 %s49, 1
        %s209 = scalar_lea.sflag [#allocation6], %s208
        %s210 = sand.u32 %s49, 1
        %s211 = smul.addr %s210, 2
        %s212 = scalar_lea.vmem [#allocation5], %s211
        // Predicated region
        $region33: #{tpu_custom_call.1} parent=31 // pred_check
          %p213 = pneg %p62
        $region34: #{tpu_custom_call.1} parent=31 // pred_check_branch
          %215 = sbr.rel (%p213) target = $region36
        $region35: #{tpu_custom_call.1} parent=31 // pred_region
          %216 = dma.done %s209, 32
        $region36: #{tpu_custom_call.1} parent=31 // pred_fallthru
          _
        %s217 = sand.u32 %s79, 1
        %s218 = scalar_lea.sflag [#allocation8], %s217
        %s219 = sand.u32 %s79, 1
        %s220 = smul.addr %s219, 2
        %s221 = scalar_lea.vmem [#allocation7], %s220
        // Predicated region
        $region37: #{tpu_custom_call.1} parent=31 // pred_check
          %p222 = pneg %p92
        $region38: #{tpu_custom_call.1} parent=31 // pred_check_branch
          %224 = sbr.rel (%p222) target = $region40
        $region39: #{tpu_custom_call.1} parent=31 // pred_region
          %225 = dma.done %s218, 32
        $region40: #{tpu_custom_call.1} parent=31 // pred_fallthru
          _
        %s226 = sand.u32 %s49, 1
        %s227 = scalar_lea.sflag [#allocation6], %s226
        %s228 = sand.u32 %s49, 1
        %s229 = smul.addr %s228, 2
        %s230 = scalar_lea.vmem [#allocation5], %s229
        %p231 = pneg %p62
        %p232 = pneg %p59
        %s233 = sand.u32 %s79, 1
        %s234 = scalar_lea.sflag [#allocation8], %s233
        %s235 = sand.u32 %s79, 1
        %s236 = smul.addr %s235, 2
        %s237 = scalar_lea.vmem [#allocation7], %s236
        %p238 = pneg %p92
        %p239 = pneg %p89
        %p240 = pneg %p113
        %p241 = pneg %p110
        %p242 = pneg %p139
        %p243 = pneg %p136
        %p244 = scmp.lt.s32.totalorder %s29, 1
        %s245 = scalar_select %p244, %s29, 1
        %s246 = scalar_lea.vmem %s4, %s245
        %s247 = smul.u32 %s29, 4
        %s248 = sadd.s32 %s247, %s30
        %s249 = smul.u32 %s29, 4
        %s250 = sadd.s32 %s249, %s30
        %p251 = scmp.lt.s32.totalorder %s29, 1
        %s252 = scalar_select %p251, %s29, 1
        %s253 = scalar_lea.vmem %s4, %s252
        %p254 = scmp.eq.s32.totalorder %s30, 0
        // Predicated region
        $region41: #{tpu_custom_call.1} parent=31 // pred_check
          %p255 = pneg %p254
        $region42: #{tpu_custom_call.1} parent=31 // pred_check_branch
          %257 = sbr.rel (%p255) target = $region44
        $region43: #{tpu_custom_call.1} parent=31 // pred_region
          %258 = vst [vmem:[#allocation2] sm:$0x3] 0.0
        $region44: #{tpu_custom_call.1} parent=31 // pred_fallthru
          _
        %s259 = smul.u32 %s29, 4
        %s260 = sadd.s32 %s259, %s30
        %v261 = vld [vmem:[%s212] sm:$0x3]
        %v262 = vld [vmem:[%s221] sm:$0x3]
        %v263 = vsub.f32 %v261, %v262
        %v264 = vmul.f32 %v263, %v263
        %s265 = sld [smem:[#allocation4 + %s260]]
        %v266 = vstv %s265
        %v267 = vmul.f32 %v266, %v264
        %v268 = vld [vmem:[#allocation2] sm:$0x3]
        %v269 = vadd.f32 %v268, %v267
        %270 = vst [vmem:[#allocation2] sm:$0x3] %v269
        %p271 = scmp.eq.s32.totalorder %s30, 3
        // Predicated region
        $region45: #{tpu_custom_call.1} parent=31 // pred_check
          %p272 = pneg %p271
        $region46: #{tpu_custom_call.1} parent=31 // pred_check_branch
          %274 = sbr.rel (%p272) target = $region48
        $region47: #{tpu_custom_call.1} parent=31 // pred_region
          %v275 = vld [vmem:[#allocation2] sm:$0x3]
          %v276 = vld [vmem:[%s3] sm:$0x3]
          %v277 = vmul.f32 %v275, %v276
          %vm278 = vcmask 1041408
          %v279 = vsel %vm278, %v277, 0.0
          %280 = vadd.xlane.f32.xlu0 %v279
          %v281 = vpop.xlane.xlu0 %280
          %v282 = vrot.slane %v281, 4
          %v283 = vadd.f32 %v281, %v282
          %v284 = vrot.slane %v283, 2
          %v285 = vadd.f32 %v283, %v284
          %v286 = vrot.slane %v285, 1
          %v287 = vadd.f32 %v285, %v286
          %s288 = vtos %v287
          %s289 = smul.f32 %s288, 0.00048828125
          %v290 = vstv %s289
          %vm291 = vcmask 0
          %292 = vst.msk [vmem:[%s253] sm:$0x1] %vm291, %v290
        $region48: #{tpu_custom_call.1} parent=31 // pred_fallthru
          _
        %p293 = scmp.lt.s32.totalorder %s29, 1
        %s294 = scalar_select %p293, %s29, 1
        %s295 = scalar_lea.vmem %s4, %s294
        // Predicated region
        $region49: #{tpu_custom_call.1} parent=31 // pred_check
          %p296 = pneg %p136
        $region50: #{tpu_custom_call.1} parent=31 // pred_check_branch
          %298 = sbr.rel (%p296) target = $region52
        $region51: #{tpu_custom_call.1} parent=31 // pred_region
          _
        $region52: #{tpu_custom_call.1} parent=31 // pred_fallthru
          _
      $region32: #{tpu_custom_call.1} parent=5 // pred_fallthru
        _
      %p299 = scmp.le.s32.totalorder 2, %s20
      // Predicated region
      $region53: #{tpu_custom_call.1} parent=5 // pred_check
        %p300 = pneg %p299
      $region54: #{tpu_custom_call.1} parent=5 // pred_check_branch
        %302 = sbr.rel (%p300) target = $region56
      $region55: #{tpu_custom_call.1} parent=5 // pred_region
        %s303 = ssub.s32 %s20, 2
        // Predicated region
        $region57: #{tpu_custom_call.1} parent=55 // pred_check
          %p304 = pneg %p142
        $region58: #{tpu_custom_call.1} parent=55 // pred_check_branch
          %306 = sbr.rel (%p304) target = $region60
        $region59: #{tpu_custom_call.1} parent=55 // pred_region
          %p307 = scmp.lt.s32.totalorder %s31, 1
          %s308 = scalar_select %p307, %s31, 1
          %s309 = scalar_lea.vmem %s4, %s308
        $region60: #{tpu_custom_call.1} parent=55 // pred_fallthru
          _
      $region56: #{tpu_custom_call.1} parent=5 // pred_fallthru
        _
    $region6: #{tpu_custom_call.1} parent=1 // loop_footer
      %s24 = sadd.s32 1, %s20
    $region7: #{tpu_custom_call.1} parent=1 // loop_footer_branch
      %19 = sbr.rel target = $region3
    $region8: #{tpu_custom_call.1} parent=1 // loop_exit
      _
    %310 = vsyncpa [#allocation6], 1
    %s311 = scalar_lea.sflag [#allocation6], 1
    %312 = vsyncpa %s311, 1
    %313 = vsyncpa [#allocation8], 1
    %s314 = scalar_lea.sflag [#allocation8], 1
    %315 = vsyncpa %s314, 1

</llo_original>
